<compile_context>
chip_gen: v5e
topology: v5e:2x2
jax: 0.10.0
libtpu: 0.0.40
codegen_flags: <defaults>
</compile_context>

<pallas_src>
import jax
import jax.numpy as jnp
from jax.experimental import pallas as pl
from jax.experimental.pallas import tpu as pltpu


_LANE = 128                       # vreg lane width
_TILE_ROWS = 2048                 # rows per block; multiple of 32 (f32/bf16/fp8 friendly)
_LANE_TILE = _TILE_ROWS * _LANE   # elements per block for the ragged (1, n) fallback


def _identity_kernel(x_ref, o_ref):
    # Pure pass-through: QuantDequantNone does not quantize nor dequantize.
    o_ref[...] = x_ref[...]


def quant_dequant_none(x: jax.Array) -> jax.Array:
    """Identity forward of QuantDequantNone, routed through a Pallas TPU kernel.

    Works for any shape/dtype.  Internally flattens to a lane-dense 2D slab using
    free reshapes only (no padding / concatenation / slicing).
    """
    orig_shape = x.shape
    n = x.size
    if n == 0:
        # Zero-element input: nothing to stream; pallas_call with grid=(0,) is pointless.
        return x

    flat = x.reshape(-1)  # free view (contiguous, row-major)

    if n % _LANE == 0:
        # Fast path: lane-dense (rows, 128) slab, tiled over rows.
        rows = n // _LANE
        x2d = flat.reshape(rows, _LANE)                       # free view
        tile_rows = _TILE_ROWS if rows >= _TILE_ROWS else rows
        block = (tile_rows, _LANE)                            # (mult-of-8 | full, 128)
        grid = (pl.cdiv(rows, tile_rows),)                    # partial last block masked
        index_map = lambda i: (i, 0)
    else:
        # Rare ragged case: single lane-dense row, tiled along lanes.
        x2d = flat.reshape(1, n)                              # free view
        tile_lane = _LANE_TILE if n >= _LANE_TILE else n
        block = (1, tile_lane)                                # (full, mult-of-128 | full)
        grid = (pl.cdiv(n, tile_lane),)
        index_map = lambda i: (0, i)

    out2d = pl.pallas_call(
        _identity_kernel,
        out_shape=jax.ShapeDtypeStruct(x2d.shape, x.dtype),
        grid=grid,
        in_specs=[pl.BlockSpec(block, index_map)],
        out_specs=pl.BlockSpec(block, index_map),
        compiler_params=pltpu.CompilerParams(
            dimension_semantics=("parallel",),
        ),
    )(x2d)

    return out2d.reshape(orig_shape)  # free view


class QuantDequantNone:
    """JAX analogue of the PyTorch QuantDequantNone module.

    __init__ stores dtype metadata only (no parameter affects forward).  The
    zero_point present when use_qdq=True in the torch module is initialized
    deterministically to 0.0 but is unused by forward, matching the original.
    """

    def __init__(self, lp_dtype=jnp.float8_e4m3fn, hp_dtype=jnp.bfloat16, **kwargs):
        self.lp_dtype = lp_dtype
        self.hp_dtype = hp_dtype
        self.scale_format = kwargs.get("scale_format", "CONST")
        self.use_qdq = kwargs.get("use_qdq", False)
        if self.use_qdq:
            # TODO(synk): HPU/Gaudi2-specific fnuz range override has no TPU equivalent.
            self.quant_min = float(jnp.finfo(self.lp_dtype).min)
            self.quant_max = float(jnp.finfo(self.lp_dtype).max)
            self.zero_point = jnp.array(0.0, dtype=jnp.float32)

    def forward(self, *args, **kwargs):
        # Identity: returns args[0], streamed through the Pallas kernel hot path.
        return quant_dequant_none(args[0])

    def __call__(self, *args, **kwargs):
        return self.forward(*args, **kwargs)

    def extra_repr(self) -> str:
        return (f"lp_dtype={self.lp_dtype}, hp_dtype={self.hp_dtype}, "
                f"doesn't quantize nor dequantize")


if __name__ == "__main__":
    key = jax.random.PRNGKey(0)
    mod = QuantDequantNone(lp_dtype=jnp.float8_e4m3fn, hp_dtype=jnp.float32)

    # NCHW activation, small shapes: batch=2, channels=4, spatial=16 (2048 elems,
    # divisible by 128 -> fast row-tiled path).
    x = jax.random.normal(key, (2, 4, 16, 16), dtype=jnp.float32)
    y = jax.block_until_ready(mod(x))
    assert y.shape == x.shape, (y.shape, x.shape)
    assert y.dtype == x.dtype, (y.dtype, x.dtype)
    assert bool(jnp.array_equal(y, x)), "identity mismatch (f32 path)"

    # Ragged + low-precision check: 105 elements (not divisible by 128) in bf16,
    # exercising the (1, n) lane-tiled fallback with no padding.
    x2 = jax.random.normal(jax.random.PRNGKey(0), (3, 5, 7), dtype=jnp.bfloat16)
    y2 = jax.block_until_ready(mod(x2))
    assert y2.shape == x2.shape and y2.dtype == x2.dtype
    assert bool(jnp.array_equal(y2, x2)), "identity mismatch (ragged bf16 path)"

    print("KERNEL_OK")
</pallas_src>

<mosaic_0001>
module attributes {stable_mosaic.version = 11 : i64} {
  func.func @_identity_kernel(%arg0: i32, %arg1: memref<16x128xf32, #tpu.memory_space<vmem>>, %arg2: memref<16x128xf32, #tpu.memory_space<vmem>>) attributes {dimension_semantics = [#tpu.dimension_semantics<parallel>], iteration_bounds = array<i64: 1>, scalar_prefetch = 0 : i64, scratch_operands = 0 : i64, tpu.core_type = #tpu.core_type<tc>, window_params = [{transform_indices = @transform_0, window_bounds = array<i64: 16, 128>}, {transform_indices = @transform_1, window_bounds = array<i64: 16, 128>}]} {
    %c0 = arith.constant 0 : index
    %c0_0 = arith.constant 0 : index
    %0 = vector.load %arg1[%c0, %c0_0] : memref<16x128xf32, #tpu.memory_space<vmem>>, vector<16x128xf32>
    %c0_1 = arith.constant 0 : index
    %c0_2 = arith.constant 0 : index
    %1 = vector.load %arg2[%c0_1, %c0_2] : memref<16x128xf32, #tpu.memory_space<vmem>>, vector<16x128xf32>
    tpu.vector_store %arg2[%c0_1, %c0_2], %0 {strides = array<i32>} : memref<16x128xf32, #tpu.memory_space<vmem>>, vector<16x128xf32>,
    return
  }
  func.func @transform_0(%arg0: i32) -> (i32, i32) {
    %c0_i32 = arith.constant 0 : i32
    %c0_i32_0 = arith.constant 0 : i32
    return %arg0, %c0_i32 : i32, i32
  }
  func.func @transform_1(%arg0: i32) -> (i32, i32) {
    %c0_i32 = arith.constant 0 : i32
    %c0_i32_0 = arith.constant 0 : i32
    return %arg0, %c0_i32 : i32, i32
  }
}

</mosaic_0001>

<llo_original>
// kernel: tpu_custom_call.1
$region0: #{tpu_custom_call.1}
  #allocation0 [shape = 'u32[]', space=smem, size = 0x4, offset = 0x4, fixed_abs, tag = 'smem constant byte address 0x4 - core index']
  #allocation1 [shape = 'u32[72,128]{1,0:T(1,128)}', space=vmem, size = 0x9000, scoped, tag = 'internal scratch']
  %s0 = inlined_call_operand.hbm [shape: f32[16,128], index: 0, kind: input, shape index: {}]
  %s1 = inlined_call_operand.hbm [shape: f32[16,128], index: 1, kind: output, shape index: {}]
  %s2 = sld [smem:[#allocation0]]
  $region18: #{tpu_custom_call.1} parent=0
    _
  %s4 = ssub.s32 1, %s2
  %s5 = scalar_select 0, %s4, %s2
  $region1: #{tpu_custom_call.1} parent=0
    #allocation2 [shape = 'u8[8192]{0}', space=vmem, size = 0x2000, scoped, tag = 'input window, operand 0, single buffered']
    #allocation3 [shape = 's32[1]{0}', space=sflag, size = 0x4, scoped, tag = 'scoped memory for tpu_custom_call.1']
    #allocation4 [shape = 's32[1]{0}', space=sflag, size = 0x4, scoped, tag = 'scoped memory for tpu_custom_call.1']
    #allocation5 [shape = 'u8[8192]{0}', space=vmem, size = 0x2000, scoped, tag = 'output window, operand 0, single buffered']
    %6 = vsyncpa [#allocation3], 0
    %7 = vsyncpa [#allocation4], 0
    // Predicated region
    $region2: #{tpu_custom_call.1} parent=1 // pred_check
      _
    $region3: #{tpu_custom_call.1} parent=1 // pred_check_branch
      %9 = sbr.rel (0) target = $region5
    $region4: #{tpu_custom_call.1} parent=1 // pred_region
      %11 = vsyncadd [#allocation3], 0
      %s12 = sshll.u32 %s0, 4
      %s13 = int_to_ptr.hbm [resolvable:$true] %s12
      %s14 = sshll.u32 [#allocation2], 4
      %s15 = int_to_ptr.vmem [resolvable:$true] %s14
      %20 = dma.hbm_to_vmem [thread:$0]  %s13, 256, %s15, [#allocation3], 128, 128, 8
    $region5: #{tpu_custom_call.1} parent=1 // pred_fallthru
      _
    // Predicated region
    $region6: #{tpu_custom_call.1} parent=1 // pred_check
      _
    $region7: #{tpu_custom_call.1} parent=1 // pred_check_branch
      %22 = sbr.rel (0) target = $region9
    $region8: #{tpu_custom_call.1} parent=1 // pred_region
      %24 = dma.done [#allocation3], 256
    $region9: #{tpu_custom_call.1} parent=1 // pred_fallthru
      _
    %v25 = vld [vmem:[#allocation2] sm:$0xff]
    %v26 = vld [vmem:[#allocation2 + $0x8] sm:$0xff]
    %27 = vst [vmem:[#allocation5] sm:$0xff] %v25
    %28 = vst [vmem:[#allocation5 + $0x8] sm:$0xff] %v26
    // Predicated region
    $region10: #{tpu_custom_call.1} parent=1 // pred_check
      _
    $region11: #{tpu_custom_call.1} parent=1 // pred_check_branch
      %30 = sbr.rel (0) target = $region13
    $region12: #{tpu_custom_call.1} parent=1 // pred_region
      %32 = vsyncadd [#allocation4], 0
      %s33 = sshll.u32 [#allocation5], 4
      %s34 = int_to_ptr.vmem [resolvable:$true] %s33
      %s35 = sshll.u32 %s1, 4
      %s36 = int_to_ptr.hbm [resolvable:$true] %s35
      %41 = dma.vmem_to_hbm [thread:$0]  %s34, 256, %s36, [#allocation4], 128, 128, 8
    $region13: #{tpu_custom_call.1} parent=1 // pred_fallthru
      _
    // Predicated region
    $region14: #{tpu_custom_call.1} parent=1 // pred_check
      _
    $region15: #{tpu_custom_call.1} parent=1 // pred_check_branch
      %43 = sbr.rel (0) target = $region17
    $region16: #{tpu_custom_call.1} parent=1 // pred_region
      %45 = dma.done [#allocation4], 256
    $region17: #{tpu_custom_call.1} parent=1 // pred_fallthru
      _
    %46 = vsyncpa [#allocation3], 1
    %47 = vsyncpa [#allocation4], 1

</llo_original>
